<compile_context>
chip_gen: v6e
topology: v6e:2x2x1
jax: 0.10.0
libtpu: 0.0.40
codegen_flags: <defaults>
</compile_context>

<pallas_src>
import math
from functools import partial

import jax
import jax.numpy as jnp
from jax import lax
from jax.experimental import pallas as pl
from jax.experimental.pallas import tpu as pltpu

LN_EPS = 1e-5          # PyTorch nn.LayerNorm default
NEG_INF = -1e30        # mask applied in f32 (bf16-safe: p is cast AFTER exp)


def _layer_norm(v, w, b):
    # f32 VPU math (kept f32 even though MXU operands are bf16)
    mu = jnp.mean(v, axis=-1, keepdims=True)
    var = jnp.mean((v - mu) ** 2, axis=-1, keepdims=True)
    return (v - mu) * lax.rsqrt(var + LN_EPS) * w + b


def _gelu_tanh(x):
    # GPT-2 style tanh-approximate GELU, reduced VALU op count:
    #   0.5*x*(1+tanh(c*(x+0.044715*x^3))) == x*(0.5 + 0.5*tanh(x*(c + c*0.044715*x^2)))
    # TODO(synk): if the reference FeedForward used nn.GELU() (erf), swap to exact erf GELU.
    c = math.sqrt(2.0 / math.pi)
    x2 = x * x
    t = jnp.tanh(x * (c + (c * 0.044715) * x2))
    return x * (0.5 + 0.5 * t)


# --------------------- Kernel A: LN1 + fused QKV projection -------------------

def ln_qkv_kernel(x_ref, ln1_w_ref, ln1_b_ref, qkv_w_ref, qkv_b_ref, o_ref):
    x = x_ref[0]                                            # (TS, D) f32
    h = _layer_norm(x, ln1_w_ref[0], ln1_b_ref[0])
    qkv = lax.dot_general(h.astype(jnp.bfloat16), qkv_w_ref[...],
                          (((1,), (0,)), ((), ())),
                          preferred_element_type=jnp.float32)
    qkv = qkv + qkv_b_ref[0]
    o_ref[0] = qkv.astype(o_ref.dtype)                      # lane-dense (TS, 3D) bf16 store


# ------- Kernel B: flash attention + proj + LN2/FFN + residuals (epilogue) ----

def attn_ffn_kernel(x_ref, q_ref, k_ref, v_ref,
                    proj_w_ref, proj_b_ref,
                    ln2_w_ref, ln2_b_ref,
                    fc1_w_ref, fc1_b_ref,
                    fc2_w_ref, fc2_b_ref,
                    o_ref,
                    m_s, l_s, acc_s, y_s,
                    *, tq, tk, scale):
    qi = pl.program_id(1)
    h = pl.program_id(2)
    ki = pl.program_id(3)
    nh = pl.num_programs(2)
    nk = pl.num_programs(3)

    @pl.when((h == 0) & (ki == 0))
    def _init_proj_acc():
        y_s[...] = jnp.zeros_like(y_s)

    @pl.when(ki == 0)
    def _init_head():
        m_s[...] = jnp.full_like(m_s, -jnp.inf)
        l_s[...] = jnp.zeros_like(l_s)
        acc_s[...] = jnp.zeros_like(acc_s)

    # Skip KV tiles that lie entirely above the causal diagonal.
    @pl.when(ki * tk <= qi * tq + (tq - 1))
    def _flash_update():
        q = q_ref[0, 0]                                     # (TQ, hd) bf16
        k = k_ref[0, 0]                                     # (TK, hd) bf16
        v = v_ref[0, 0]                                     # (TK, hd) bf16
        # QK^T via dot_general contracting the last dims (no explicit .T / XLU transpose)
        s = lax.dot_general(q, k, (((1,), (1,)), ((), ())),
                            preferred_element_type=jnp.float32) * scale
        row = qi * tq + lax.broadcasted_iota(jnp.int32, (tq, tk), 0)
        col = ki * tk + lax.broadcasted_iota(jnp.int32, (tq, tk), 1)
        s = jnp.where(col <= row, s, NEG_INF)               # f32 mask
        m_prev = m_s[...]
        m_new = jnp.maximum(m_prev, jnp.max(s, axis=-1, keepdims=True))
        alpha = jnp.exp(m_prev - m_new)
        p = jnp.exp(s - m_new)                              # f32 softmax math
        l_s[...] = alpha * l_s[...] + jnp.sum(p, axis=-1, keepdims=True)
        acc_s[...] = alpha * acc_s[...] + lax.dot_general(
            p.astype(jnp.bfloat16), v, (((1,), (0,)), ((), ())),
            preferred_element_type=jnp.float32)
        m_s[...] = m_new

    # Per-head finalize: project this head's output and accumulate.
    #   concat(heads) @ Wproj == sum_h head_h @ Wproj[h*hd:(h+1)*hd, :]
    @pl.when(ki == nk - 1)
    def _finalize_head():
        attn_h = acc_s[...] * pl.reciprocal(l_s[...], approx=True)   # (TQ, hd) f32
        pw = proj_w_ref[...].astype(jnp.bfloat16)                    # (hd, D)
        y_s[...] += lax.dot_general(attn_h.astype(jnp.bfloat16), pw,
                                    (((1,), (0,)), ((), ())),
                                    preferred_element_type=jnp.float32)

    # Epilogue (once per (batch, q-tile)): residual + FFN on LN2 of ORIGINAL x
    # (matches the module: x = idx + attn(LN1(idx)); x = x + ffn(LN2(idx))).
    @pl.when((h == nh - 1) & (ki == nk - 1))
    def _epilogue():
        x = x_ref[0]                                        # (TQ, D) f32
        attn_out = y_s[...] + proj_b_ref[0]
        h2 = _layer_norm(x, ln2_w_ref[0], ln2_b_ref[0])
        f = lax.dot_general(h2.astype(jnp.bfloat16), fc1_w_ref[...],
                            (((1,), (0,)), ((), ())),
                            preferred_element_type=jnp.float32) + fc1_b_ref[0]
        f = _gelu_tanh(f)
        f = lax.dot_general(f.astype(jnp.bfloat16), fc2_w_ref[...],
                            (((1,), (0,)), ((), ())),
                            preferred_element_type=jnp.float32) + fc2_b_ref[0]
        o_ref[0] = (x + attn_out + f).astype(o_ref.dtype)


def gpt_block(x, params, num_heads, *, seq_block=128):
    B, T, D = x.shape
    assert D % num_heads == 0
    hd = D // num_heads
    ts = tq = tk = min(seq_block, T)
    assert T % tq == 0 and T % tk == 0   # TODO(synk): pad/mask ragged sequence lengths

    bf16 = jnp.bfloat16
    # Cast matmul weights to bf16 ONCE in the wrapper (not per grid step).
    qkv_w = params["qkv_w"].astype(bf16)
    fc1_w = params["fc1_w"].astype(bf16)
    fc2_w = params["fc2_w"].astype(bf16)
    # proj_w kept f32 so its per-head (hd, D) row-blocks stay 8-row aligned for any hd;
    # it is cast to bf16 inside the kernel right before the MXU.
    proj_w = params["proj_w"]

    # ---- Kernel A: qkv = LN1(x) @ Wqkv + b, lane-dense (B, T, 3D) bf16
    qkv = pl.pallas_call(
        ln_qkv_kernel,
        out_shape=jax.ShapeDtypeStruct((B, T, 3 * D), bf16),
        grid=(B, T // ts),
        in_specs=[
            pl.BlockSpec((1, ts, D), lambda b, i: (b, i, 0)),
            pl.BlockSpec((1, D), lambda b, i: (0, 0)),
            pl.BlockSpec((1, D), lambda b, i: (0, 0)),
            pl.BlockSpec((D, 3 * D), lambda b, i: (0, 0)),
            pl.BlockSpec((1, 3 * D), lambda b, i: (0, 0)),
        ],
        out_specs=pl.BlockSpec((1, ts, 3 * D), lambda b, i: (b, i, 0)),
        compiler_params=pltpu.CompilerParams(
            dimension_semantics=("parallel", "parallel"),
            vmem_limit_bytes=48 * 1024 * 1024),
    )(x, params["ln1_w"], params["ln1_b"], qkv_w, params["qkv_b"])

    # Wrapper-side layout plumbing (XLA HBM transpose, not in-kernel compute):
    # (B, T, 3D) -> (B, 3, H, T, hd) so kernel-B q/k/v blocks cover the full last dim.
    qkvh = qkv.reshape(B, T, 3, num_heads, hd).transpose(0, 2, 3, 1, 4)
    q, k, v = qkvh[:, 0], qkvh[:, 1], qkvh[:, 2]            # each (B, H, T, hd) bf16

    # ---- Kernel B: flash attention + proj + LN2/FFN + residuals
    # Constant-index weight blocks stay resident (no refetch across steps).
    # TODO(synk): for very large D on v7x (64 MiB VMEM), tile fc1_w/fc2_w over the
    #             4D hidden dim with another "arbitrary" grid axis and single-buffer
    #             the constant weight specs (pl.Buffered(1)).
    kernel = partial(attn_ffn_kernel, tq=tq, tk=tk, scale=1.0 / math.sqrt(hd))
    out = pl.pallas_call(
        kernel,
        out_shape=jax.ShapeDtypeStruct((B, T, D), x.dtype),
        grid=(B, T // tq, num_heads, T // tk),
        in_specs=[
            pl.BlockSpec((1, tq, D), lambda b, qi, h, ki: (b, qi, 0)),         # x (residual + LN2)
            pl.BlockSpec((1, 1, tq, hd), lambda b, qi, h, ki: (b, h, qi, 0)),  # q
            pl.BlockSpec((1, 1, tk, hd), lambda b, qi, h, ki: (b, h, ki, 0)),  # k
            pl.BlockSpec((1, 1, tk, hd), lambda b, qi, h, ki: (b, h, ki, 0)),  # v
            pl.BlockSpec((hd, D), lambda b, qi, h, ki: (h, 0)),                # proj_w rows for head h
            pl.BlockSpec((1, D), lambda b, qi, h, ki: (0, 0)),                 # proj_b
            pl.BlockSpec((1, D), lambda b, qi, h, ki: (0, 0)),                 # ln2_w
            pl.BlockSpec((1, D), lambda b, qi, h, ki: (0, 0)),                 # ln2_b
            pl.BlockSpec((D, 4 * D), lambda b, qi, h, ki: (0, 0)),             # fc1_w
            pl.BlockSpec((1, 4 * D), lambda b, qi, h, ki: (0, 0)),             # fc1_b
            pl.BlockSpec((4 * D, D), lambda b, qi, h, ki: (0, 0)),             # fc2_w
            pl.BlockSpec((1, D), lambda b, qi, h, ki: (0, 0)),                 # fc2_b
        ],
        out_specs=pl.BlockSpec((1, tq, D), lambda b, qi, h, ki: (b, qi, 0)),
        scratch_shapes=[
            pltpu.VMEM((tq, 1), jnp.float32),    # m: online-softmax running max
            pltpu.VMEM((tq, 1), jnp.float32),    # l: online-softmax running denom
            pltpu.VMEM((tq, hd), jnp.float32),   # acc: per-head attention accumulator
            pltpu.VMEM((tq, D), jnp.float32),    # y: projected attention, summed over heads
        ],
        compiler_params=pltpu.CompilerParams(
            dimension_semantics=("parallel", "parallel", "arbitrary", "arbitrary"),
            vmem_limit_bytes=48 * 1024 * 1024),
    )(x, q, k, v, proj_w, params["proj_b"],
      params["ln2_w"], params["ln2_b"],
      fc1_w, params["fc1_b"], fc2_w, params["fc2_b"])
    return out


def gpt_block_ref(x, params, num_heads):
    """Pure-JAX f32 reference mirroring the PyTorch forward."""
    def ln(v, w, b):
        mu = v.mean(-1, keepdims=True)
        var = ((v - mu) ** 2).mean(-1, keepdims=True)
        return (v - mu) / jnp.sqrt(var + LN_EPS) * w + b

    B, T, D = x.shape
    hd = D // num_heads
    h = ln(x, params["ln1_w"][0], params["ln1_b"][0])
    qkv = h @ params["qkv_w"] + params["qkv_b"][0]
    q, k, v = jnp.split(qkv, 3, axis=-1)
    sh = lambda t: t.reshape(B, T, num_heads, hd).transpose(0, 2, 1, 3)
    q, k, v = sh(q), sh(k), sh(v)
    s = jnp.einsum("bhqd,bhkd->bhqk", q, k) / math.sqrt(hd)
    mask = jnp.tril(jnp.ones((T, T), bool))
    s = jnp.where(mask, s, NEG_INF)
    p = jax.nn.softmax(s, axis=-1)
    a = jnp.einsum("bhqk,bhkd->bhqd", p, v).transpose(0, 2, 1, 3).reshape(B, T, D)
    a = a @ params["proj_w"] + params["proj_b"][0]
    x1 = x + a
    h2 = ln(x, params["ln2_w"][0], params["ln2_b"][0])
    f = h2 @ params["fc1_w"] + params["fc1_b"][0]
    f = 0.5 * f * (1.0 + jnp.tanh(math.sqrt(2.0 / math.pi) * (f + 0.044715 * f ** 3)))
    f = f @ params["fc2_w"] + params["fc2_b"][0]
    return x1 + f


def init_params(key, emb_dim):
    ks = jax.random.split(key, 10)
    s = 0.02
    f32 = jnp.float32
    return {
        "ln1_w": 1.0 + 0.1 * jax.random.normal(ks[0], (1, emb_dim), f32),
        "ln1_b": 0.1 * jax.random.normal(ks[1], (1, emb_dim), f32),
        "qkv_w": s * jax.random.normal(ks[2], (emb_dim, 3 * emb_dim), f32),
        "qkv_b": s * jax.random.normal(ks[3], (1, 3 * emb_dim), f32),
        "proj_w": s * jax.random.normal(ks[4], (emb_dim, emb_dim), f32),
        "proj_b": s * jax.random.normal(ks[5], (1, emb_dim), f32),
        "ln2_w": 1.0 + 0.1 * jax.random.normal(ks[6], (1, emb_dim), f32),
        "ln2_b": 0.1 * jax.random.normal(ks[7], (1, emb_dim), f32),
        "fc1_w": s * jax.random.normal(ks[8], (emb_dim, 4 * emb_dim), f32),
        "fc1_b": jnp.zeros((1, 4 * emb_dim), f32),
        "fc2_w": s * jax.random.normal(ks[9], (4 * emb_dim, emb_dim), f32),
        "fc2_b": jnp.zeros((1, emb_dim), f32),
    }


if __name__ == "__main__":
    B, T, D, H = 2, 64, 32, 4          # batch, seq, emb_dim, num_heads (head_dim = 8)
    key = jax.random.PRNGKey(0)
    k_x, k_p = jax.random.split(key)
    x = jax.random.normal(k_x, (B, T, D), jnp.float32)
    params = init_params(k_p, D)

    # seq_block=32 -> 2 q-tiles x 4 heads x 2 kv-tiles per batch element, exercising
    # the online softmax across KV tiles, the causal-skip, and head accumulation.
    out = gpt_block(x, params, num_heads=H, seq_block=32)
    out = jax.block_until_ready(out)

    ref = gpt_block_ref(x, params, num_heads=H)
    assert out.shape == (B, T, D)
    max_err = float(jnp.max(jnp.abs(out - ref)))
    # bf16 MXU operands + approx reciprocal vs. pure-f32 reference -> loose tolerance.
    assert jnp.allclose(out, ref, atol=2e-2, rtol=2e-2), max_err

    print("KERNEL_OK")
</pallas_src>

<mosaic_0001>
module attributes {stable_mosaic.version = 11 : i64} {
  func.func @ln_qkv_kernel(%arg0: i32, %arg1: i32, %arg2: memref<1x32x32xf32, #tpu.memory_space<vmem>>, %arg3: memref<1x32xf32, #tpu.memory_space<vmem>>, %arg4: memref<1x32xf32, #tpu.memory_space<vmem>>, %arg5: memref<32x96xbf16, #tpu.memory_space<vmem>>, %arg6: memref<1x96xf32, #tpu.memory_space<vmem>>, %arg7: memref<1x32x96xbf16, #tpu.memory_space<vmem>>) attributes {dimension_semantics = [#tpu.dimension_semantics<parallel>, #tpu.dimension_semantics<parallel>], iteration_bounds = array<i64: 2, 2>, scalar_prefetch = 0 : i64, scratch_operands = 0 : i64, tpu.core_type = #tpu.core_type<tc>, window_params = [{transform_indices = @transform_0, window_bounds = array<i64: 1, 32, 32>}, {pipeline_mode = #tpu.pipeline_mode<synchronous>, transform_indices = @transform_1, window_bounds = array<i64: 1, 32>}, {pipeline_mode = #tpu.pipeline_mode<synchronous>, transform_indices = @transform_2, window_bounds = array<i64: 1, 32>}, {pipeline_mode = #tpu.pipeline_mode<synchronous>, transform_indices = @transform_3, window_bounds = array<i64: 32, 96>}, {pipeline_mode = #tpu.pipeline_mode<synchronous>, transform_indices = @transform_4, window_bounds = array<i64: 1, 96>}, {transform_indices = @transform_5, window_bounds = array<i64: 1, 32, 96>}]} {
    %c0 = arith.constant 0 : index
    %c0_0 = arith.constant 0 : index
    %c0_1 = arith.constant 0 : index
    %0 = vector.load %arg2[%c0, %c0_0, %c0_1] : memref<1x32x32xf32, #tpu.memory_space<vmem>>, vector<1x32x32xf32>
    %1 = vector.shape_cast %0 : vector<1x32x32xf32> to vector<32x32xf32>
    %c0_2 = arith.constant 0 : index
    %c0_3 = arith.constant 0 : index
    %2 = vector.load %arg3[%c0_2, %c0_3] : memref<1x32xf32, #tpu.memory_space<vmem>>, vector<1x32xf32>
    %3 = vector.shape_cast %2 : vector<1x32xf32> to vector<32xf32>
    %c0_4 = arith.constant 0 : index
    %c0_5 = arith.constant 0 : index
    %4 = vector.load %arg4[%c0_4, %c0_5] : memref<1x32xf32, #tpu.memory_space<vmem>>, vector<1x32xf32>
    %5 = vector.shape_cast %4 : vector<1x32xf32> to vector<32xf32>
    %cst = arith.constant dense<0.000000e+00> : vector<32xf32>
    %6 = vector.multi_reduction <add>, %1, %cst [1] : vector<32x32xf32> to vector<32xf32>
    %7 = vector.shape_cast %6 : vector<32xf32> to vector<32x1xf32>
    %cst_6 = arith.constant 3.200000e+01 : f32
    %8 = vector.broadcast %cst_6 : f32 to vector<32x1xf32>
    %9 = arith.divf %7, %8 : vector<32x1xf32>
    %10 = vector.broadcast %9 : vector<32x1xf32> to vector<32x32xf32>
    %11 = arith.subf %1, %10 : vector<32x32xf32>
    %12 = arith.mulf %11, %11 : vector<32x32xf32>
    %cst_7 = arith.constant dense<0.000000e+00> : vector<32xf32>
    %13 = vector.multi_reduction <add>, %12, %cst_7 [1] : vector<32x32xf32> to vector<32xf32>
    %14 = vector.shape_cast %13 : vector<32xf32> to vector<32x1xf32>
    %cst_8 = arith.constant 3.200000e+01 : f32
    %15 = vector.broadcast %cst_8 : f32 to vector<32x1xf32>
    %16 = arith.divf %14, %15 : vector<32x1xf32>
    %17 = vector.broadcast %9 : vector<32x1xf32> to vector<32x32xf32>
    %18 = arith.subf %1, %17 : vector<32x32xf32>
    %cst_9 = arith.constant 9.99999974E-6 : f32
    %19 = vector.broadcast %cst_9 : f32 to vector<32x1xf32>
    %20 = arith.addf %16, %19 : vector<32x1xf32>
    %21 = math.rsqrt %20 : vector<32x1xf32>
    %22 = vector.broadcast %21 : vector<32x1xf32> to vector<32x32xf32>
    %23 = arith.mulf %18, %22 : vector<32x32xf32>
    %24 = vector.shape_cast %3 : vector<32xf32> to vector<1x32xf32>
    %25 = vector.broadcast %24 : vector<1x32xf32> to vector<32x32xf32>
    %26 = arith.mulf %23, %25 : vector<32x32xf32>
    %27 = vector.shape_cast %5 : vector<32xf32> to vector<1x32xf32>
    %28 = vector.broadcast %27 : vector<1x32xf32> to vector<32x32xf32>
    %29 = arith.addf %26, %28 : vector<32x32xf32>
    %30 = arith.truncf %29 : vector<32x32xf32> to vector<32x32xbf16>
    %c0_10 = arith.constant 0 : index
    %c0_11 = arith.constant 0 : index
    %31 = vector.load %arg5[%c0_10, %c0_11] : memref<32x96xbf16, #tpu.memory_space<vmem>>, vector<32x96xbf16>
    %cst_12 = arith.constant dense<0.000000e+00> : vector<32x96xf32>
    %32 = tpu.matmul %30, %31, %cst_12 {dimension_numbers = #tpu.dot_dimension_numbers<[1], [0], [0], [1], [0, 0, 1, 1], [], []>} : vector<32x32xbf16>, vector<32x96xbf16>, vector<32x96xf32> -> vector<32x96xf32>
    %c0_13 = arith.constant 0 : index
    %c0_14 = arith.constant 0 : index
    %33 = vector.load %arg6[%c0_13, %c0_14] : memref<1x96xf32, #tpu.memory_space<vmem>>, vector<1x96xf32>
    %34 = vector.shape_cast %33 : vector<1x96xf32> to vector<96xf32>
    %35 = vector.shape_cast %34 : vector<96xf32> to vector<1x96xf32>
    %36 = vector.broadcast %35 : vector<1x96xf32> to vector<32x96xf32>
    %37 = arith.addf %32, %36 : vector<32x96xf32>
    %38 = arith.truncf %37 : vector<32x96xf32> to vector<32x96xbf16>
    %c0_15 = arith.constant 0 : index
    %c0_16 = arith.constant 0 : index
    %c0_17 = arith.constant 0 : index
    %39 = vector.load %arg7[%c0_15, %c0_16, %c0_17] : memref<1x32x96xbf16, #tpu.memory_space<vmem>>, vector<1x32x96xbf16>
    %40 = vector.shape_cast %39 : vector<1x32x96xbf16> to vector<32x96xbf16>
    %41 = vector.shape_cast %38 : vector<32x96xbf16> to vector<1x32x96xbf16>
    tpu.vector_store %arg7[%c0_15, %c0_16, %c0_17], %41 {strides = array<i32>} : memref<1x32x96xbf16, #tpu.memory_space<vmem>>, vector<1x32x96xbf16>,
    return
  }
  func.func @transform_0(%arg0: i32, %arg1: i32) -> (i32, i32, i32) {
    %c0_i32 = arith.constant 0 : i32
    %c0_i32_0 = arith.constant 0 : i32
    return %arg0, %arg1, %c0_i32 : i32, i32, i32
  }
  func.func @transform_1(%arg0: i32, %arg1: i32) -> (i32, i32) {
    %c0_i32 = arith.constant 0 : i32
    %c0_i32_0 = arith.constant 0 : i32
    %c0_i32_1 = arith.constant 0 : i32
    return %c0_i32, %c0_i32_0 : i32, i32
  }
  func.func @transform_2(%arg0: i32, %arg1: i32) -> (i32, i32) {
    %c0_i32 = arith.constant 0 : i32
    %c0_i32_0 = arith.constant 0 : i32
    %c0_i32_1 = arith.constant 0 : i32
    return %c0_i32, %c0_i32_0 : i32, i32
  }
  func.func @transform_3(%arg0: i32, %arg1: i32) -> (i32, i32) {
    %c0_i32 = arith.constant 0 : i32
    %c0_i32_0 = arith.constant 0 : i32
    %c0_i32_1 = arith.constant 0 : i32
    return %c0_i32, %c0_i32_0 : i32, i32
  }
  func.func @transform_4(%arg0: i32, %arg1: i32) -> (i32, i32) {
    %c0_i32 = arith.constant 0 : i32
    %c0_i32_0 = arith.constant 0 : i32
    %c0_i32_1 = arith.constant 0 : i32
    return %c0_i32, %c0_i32_0 : i32, i32
  }
  func.func @transform_5(%arg0: i32, %arg1: i32) -> (i32, i32, i32) {
    %c0_i32 = arith.constant 0 : i32
    %c0_i32_0 = arith.constant 0 : i32
    return %arg0, %arg1, %c0_i32 : i32, i32, i32
  }
}

</mosaic_0001>

<llo_original>
// kernel: tpu_custom_call.1
$region0: #{tpu_custom_call.1}
  #allocation0 [shape = 'u32[]', space=smem, size = 0x4, offset = 0x4, fixed_abs, tag = 'smem constant byte address 0x4 - core index']
  #allocation1 [shape = 'u32[144,128]{1,0:T(1,128)}', space=vmem, size = 0x12000, scoped, tag = 'internal scratch']
  %s0 = inlined_call_operand.vmem [shape: f32[2,64,32], index: 0, kind: input, shape index: {}]
  %s1 = inlined_call_operand.vmem [shape: f32[1,32], index: 1, kind: input, shape index: {}]
  %s2 = inlined_call_operand.vmem [shape: f32[1,32], index: 2, kind: input, shape index: {}]
  %s3 = inlined_call_operand.vmem [shape: bf16[32,96], index: 3, kind: input, shape index: {}]
  %s4 = inlined_call_operand.vmem [shape: f32[1,96], index: 4, kind: input, shape index: {}]
  %s5 = inlined_call_operand.hbm [shape: bf16[2,64,96], index: 5, kind: output, shape index: {}]
  %s6 = sld [smem:[#allocation0]]
  $region53: #{tpu_custom_call.1} parent=0
    _
  %s8 = ssub.s32 1, %s6
  %s9 = scalar_select 0, %s8, %s6
  $region1: #{tpu_custom_call.1} parent=0
    #allocation2 [shape = 'u8[16384]{0}', space=vmem, size = 0x4000, scoped, tag = 'output window, operand 0']
    #allocation3 [shape = 's32[2]{0}', space=sflag, size = 0x8, scoped, tag = 'scoped memory for tpu_custom_call.1']
    %10 = vsyncpa [#allocation3], 0
    %s11 = scalar_lea.sflag [#allocation3], 1
    %12 = vsyncpa %s11, 0
    loop: start=0, step=1, limit=6
    $region2: #{tpu_custom_call.1} parent=1 // loop_pre_header
      _
    $region3: #{tpu_custom_call.1} parent=1 // loop_header
      %s14 = sphi 0, %s18
      %p15 = scmp.ge.s32.totalorder %s14, 6
      %s21 = sphi 0, %s33
      %s22 = sphi 0, %s29
      %s23 = sphi 0, %s21
      %s24 = sphi 0, %s22
      %s25 = sphi 0, %s23
      %s26 = sphi 0, %s24
      %s38 = sphi 0, %s40
      %s41 = sphi 0, %s38
      %s42 = sphi 0, %s41
      %s58 = sphi 0, %s42
      %s62 = sphi 0, %s62
      %s64 = sphi 0, %s62
      %s65 = sphi 0, %s64
      %s79 = sphi 0, %s65
      %s83 = sphi 0, %s83
      %s85 = sphi 0, %s83
      %s86 = sphi 0, %s85
      %s100 = sphi 0, %s86
      %s104 = sphi 0, %s104
      %s106 = sphi 0, %s104
      %s107 = sphi 0, %s106
      %s121 = sphi 0, %s107
      %s125 = sphi 0, %s125
      %s127 = sphi 0, %s125
      %s128 = sphi 0, %s127
      %s142 = sphi 0, %s128
      %s150 = sphi 0, %s152
      %s153 = sphi 0, %s150
      %s154 = sphi 0, %s153
      %s170 = sphi 0, %s154
    $region4: #{tpu_custom_call.1} parent=1 // loop_header_branch
      %17 = sbr.rel (%p15) target = $region8
    $region5: #{tpu_custom_call.1} parent=1 // loop_body
      %s19 = ssub.s32 %s14, 1
      %s20 = ssub.s32 %s14, 2
      %s27 = sadd.s32 1, %s22
      %p28 = scmp.ge.s32.totalorder %s27, 2
      %s29 = scalar_select %p28, 0, %s27
      %s30 = sadd.s32 1, %s21
      %s31 = scalar_select %p28, %s30, %s21
      %p32 = scmp.ge.s32.totalorder %s31, 2
      %s33 = scalar_select %p32, 0, %s31
      %s34 = ssub.s32 %s21, %s33
      %s35 = ssub.s32 %s22, %s29
      %s36 = sor.u32 %s34, %s35
      %p37 = scmp.eq.s32.totalorder %s36, 0
      %s39 = sadd.s32 %s38, 1
      %s40 = scalar_select %p37, %s38, %s39
      %p43 = pneg %p37
      %p44 = scmp.eq.s32.totalorder %s14, 3
      %p45 = por %p43, %p44
      %p46 = scmp.ne.s32.totalorder %s38, %s41
      %p47 = scmp.eq.s32.totalorder %s14, 0
      %p48 = por %p46, %p47
      %p49 = scmp.ne.s32.totalorder %s38, %s41
      %p50 = scmp.eq.s32.totalorder %s19, 3
      %p51 = por %p49, %p50
      %p52 = scmp.ne.s32.totalorder %s41, %s42
      %p53 = scmp.eq.s32.totalorder %s19, 0
      %p54 = por %p52, %p53
      %p55 = scmp.ne.s32.totalorder %s41, %s42
      %p56 = scmp.eq.s32.totalorder %s20, 3
      %p57 = por %p55, %p56
      %p59 = scmp.ne.s32.totalorder %s42, %s58
      %p60 = scmp.eq.s32.totalorder %s20, 0
      %p61 = por %p59, %p60
      %s63 = sadd.s32 %s62, 1
      %p66 = scmp.eq.s32.totalorder %s14, 3
      %p67 = scmp.ne.s32.totalorder %s62, %s64
      %p68 = scmp.eq.s32.totalorder %s14, 0
      %p69 = por %p67, %p68
      %p70 = scmp.ne.s32.totalorder %s62, %s64
      %p71 = scmp.eq.s32.totalorder %s19, 3
      %p72 = por %p70, %p71
      %p73 = scmp.ne.s32.totalorder %s64, %s65
      %p74 = scmp.eq.s32.totalorder %s19, 0
      %p75 = por %p73, %p74
      %p76 = scmp.ne.s32.totalorder %s64, %s65
      %p77 = scmp.eq.s32.totalorder %s20, 3
      %p78 = por %p76, %p77
      %p80 = scmp.ne.s32.totalorder %s65, %s79
      %p81 = scmp.eq.s32.totalorder %s20, 0
      %p82 = por %p80, %p81
      %s84 = sadd.s32 %s83, 1
      %p87 = scmp.eq.s32.totalorder %s14, 3
      %p88 = scmp.ne.s32.totalorder %s83, %s85
      %p89 = scmp.eq.s32.totalorder %s14, 0
      %p90 = por %p88, %p89
      %p91 = scmp.ne.s32.totalorder %s83, %s85
      %p92 = scmp.eq.s32.totalorder %s19, 3
      %p93 = por %p91, %p92
      %p94 = scmp.ne.s32.totalorder %s85, %s86
      %p95 = scmp.eq.s32.totalorder %s19, 0
      %p96 = por %p94, %p95
      %p97 = scmp.ne.s32.totalorder %s85, %s86
      %p98 = scmp.eq.s32.totalorder %s20, 3
      %p99 = por %p97, %p98
      %p101 = scmp.ne.s32.totalorder %s86, %s100
      %p102 = scmp.eq.s32.totalorder %s20, 0
      %p103 = por %p101, %p102
      %s105 = sadd.s32 %s104, 1
      %p108 = scmp.eq.s32.totalorder %s14, 3
      %p109 = scmp.ne.s32.totalorder %s104, %s106
      %p110 = scmp.eq.s32.totalorder %s14, 0
      %p111 = por %p109, %p110
      %p112 = scmp.ne.s32.totalorder %s104, %s106
      %p113 = scmp.eq.s32.totalorder %s19, 3
      %p114 = por %p112, %p113
      %p115 = scmp.ne.s32.totalorder %s106, %s107
      %p116 = scmp.eq.s32.totalorder %s19, 0
      %p117 = por %p115, %p116
      %p118 = scmp.ne.s32.totalorder %s106, %s107
      %p119 = scmp.eq.s32.totalorder %s20, 3
      %p120 = por %p118, %p119
      %p122 = scmp.ne.s32.totalorder %s107, %s121
      %p123 = scmp.eq.s32.totalorder %s20, 0
      %p124 = por %p122, %p123
      %s126 = sadd.s32 %s125, 1
      %p129 = scmp.eq.s32.totalorder %s14, 3
      %p130 = scmp.ne.s32.totalorder %s125, %s127
      %p131 = scmp.eq.s32.totalorder %s14, 0
      %p132 = por %p130, %p131
      %p133 = scmp.ne.s32.totalorder %s125, %s127
      %p134 = scmp.eq.s32.totalorder %s19, 3
      %p135 = por %p133, %p134
      %p136 = scmp.ne.s32.totalorder %s127, %s128
      %p137 = scmp.eq.s32.totalorder %s19, 0
      %p138 = por %p136, %p137
      %p139 = scmp.ne.s32.totalorder %s127, %s128
      %p140 = scmp.eq.s32.totalorder %s20, 3
      %p141 = por %p139, %p140
      %p143 = scmp.ne.s32.totalorder %s128, %s142
      %p144 = scmp.eq.s32.totalorder %s20, 0
      %p145 = por %p143, %p144
      %s146 = ssub.s32 %s21, %s33
      %s147 = ssub.s32 %s22, %s29
      %s148 = sor.u32 %s146, %s147
      %p149 = scmp.eq.s32.totalorder %s148, 0
      %s151 = sadd.s32 %s150, 1
      %s152 = scalar_select %p149, %s150, %s151
      %p155 = pneg %p149
      %p156 = scmp.eq.s32.totalorder %s14, 3
      %p157 = por %p155, %p156
      %p158 = scmp.ne.s32.totalorder %s150, %s153
      %p159 = scmp.eq.s32.totalorder %s14, 0
      %p160 = por %p158, %p159
      %p161 = scmp.ne.s32.totalorder %s150, %s153
      %p162 = scmp.eq.s32.totalorder %s19, 3
      %p163 = por %p161, %p162
      %p164 = scmp.ne.s32.totalorder %s153, %s154
      %p165 = scmp.eq.s32.totalorder %s19, 0
      %p166 = por %p164, %p165
      %p167 = scmp.ne.s32.totalorder %s153, %s154
      %p168 = scmp.eq.s32.totalorder %s20, 3
      %p169 = por %p167, %p168
      %p171 = scmp.ne.s32.totalorder %s154, %s170
      %p172 = scmp.eq.s32.totalorder %s20, 0
      %p173 = por %p171, %p172
      %p174 = scmp.le.s32.totalorder 1, %s14
      %p175 = scmp.lt.s32.totalorder %s14, 5
      %p176 = pnand %p174, %p175
      %p177 = pneg %p176
      // Predicated region
      $region9: #{tpu_custom_call.1} parent=5 // pred_check
        _
      $region10: #{tpu_custom_call.1} parent=5 // pred_check_branch
        %179 = sbr.rel (%p176) target = $region12
      $region11: #{tpu_custom_call.1} parent=5 // pred_region
        %s180 = ssub.s32 %s14, 1
        // Predicated region
        $region13: #{tpu_custom_call.1} parent=11 // pred_check
          %p181 = pneg %p75
        $region14: #{tpu_custom_call.1} parent=11 // pred_check_branch
          %183 = sbr.rel (%p181) target = $region16
        $region15: #{tpu_custom_call.1} parent=11 // pred_region
          _
        $region16: #{tpu_custom_call.1} parent=11 // pred_fallthru
          _
        // Predicated region
        $region17: #{tpu_custom_call.1} parent=11 // pred_check
          %p184 = pneg %p96
        $region18: #{tpu_custom_call.1} parent=11 // pred_check_branch
          %186 = sbr.rel (%p184) target = $region20
        $region19: #{tpu_custom_call.1} parent=11 // pred_region
          _
        $region20: #{tpu_custom_call.1} parent=11 // pred_fallthru
          _
        // Predicated region
        $region21: #{tpu_custom_call.1} parent=11 // pred_check
          %p187 = pneg %p117
        $region22: #{tpu_custom_call.1} parent=11 // pred_check_branch
          %189 = sbr.rel (%p187) target = $region24
        $region23: #{tpu_custom_call.1} parent=11 // pred_region
          _
        $region24: #{tpu_custom_call.1} parent=11 // pred_fallthru
          _
        // Predicated region
        $region25: #{tpu_custom_call.1} parent=11 // pred_check
          %p190 = pneg %p138
        $region26: #{tpu_custom_call.1} parent=11 // pred_check_branch
          %192 = sbr.rel (%p190) target = $region28
        $region27: #{tpu_custom_call.1} parent=11 // pred_region
          _
        $region28: #{tpu_custom_call.1} parent=11 // pred_fallthru
          _
      $region12: #{tpu_custom_call.1} parent=5 // pred_fallthru
        _
      %p193 = scmp.lt.s32.totalorder %s14, 4
      // Predicated region
      $region29: #{tpu_custom_call.1} parent=5 // pred_check
        %p194 = pneg %p193
      $region30: #{tpu_custom_call.1} parent=5 // pred_check_branch
        %196 = sbr.rel (%p194) target = $region32
      $region31: #{tpu_custom_call.1} parent=5 // pred_region
        // Predicated region
        $region33: #{tpu_custom_call.1} parent=31 // pred_check
          %p197 = pneg %p48
        $region34: #{tpu_custom_call.1} parent=31 // pred_check_branch
          %199 = sbr.rel (%p197) target = $region36
        $region35: #{tpu_custom_call.1} parent=31 // pred_region
          %s200 = smul.u32 4, %s22
          %p201 = scmp.lt.s32.totalorder %s21, 1
          %s202 = scalar_select %p201, %s21, 1
          %p203 = scmp.lt.s32.totalorder %s200, 7
          %s204 = scalar_select %p203, %s200, 7
          %s205 = smul.addr %s202, 8
          %s206 = sadd.s32 %s204, %s205
          %s207 = smul.addr %s206, 8
          %s208 = scalar_lea.vmem %s0, %s207
          %s209 = smul.u32 4, %s22
        $region36: #{tpu_custom_call.1} parent=31 // pred_fallthru
          _
      $region32: #{tpu_custom_call.1} parent=5 // pred_fallthru
        _
      %p210 = scmp.le.s32.totalorder 1, %s14
      %p211 = scmp.lt.s32.totalorder %s14, 5
      %p212 = pnand %p210, %p211
      %p213 = pneg %p212
      // Predicated region
      $region37: #{tpu_custom_call.1} parent=5 // pred_check
        _
      $region38: #{tpu_custom_call.1} parent=5 // pred_check_branch
        %215 = sbr.rel (%p212) target = $region40
      $region39: #{tpu_custom_call.1} parent=5 // pred_region
        %s216 = ssub.s32 %s14, 1
        %s217 = smul.u32 4, %s24
        %p218 = scmp.lt.s32.totalorder %s23, 1
        %s219 = scalar_select %p218, %s23, 1
        %p220 = scmp.lt.s32.totalorder %s217, 7
        %s221 = scalar_select %p220, %s217, 7
        %s222 = smul.addr %s219, 8
        %s223 = sadd.s32 %s221, %s222
        %s224 = smul.addr %s223, 8
        %s225 = scalar_lea.vmem %s0, %s224
        %p226 = pneg %p54
        %p227 = pneg %p51
        %p228 = pneg %p75
        %p229 = pneg %p72
        %p230 = pneg %p96
        %p231 = pneg %p93
        %p232 = pneg %p117
        %p233 = pneg %p114
        %p234 = pneg %p138
        %p235 = pneg %p135
        %p236 = pneg %p166
        %p237 = pneg %p163
        %s238 = sand.u32 %s153, 1
        %s239 = scalar_lea.sflag [#allocation3], %s238
        %s240 = sand.u32 %s153, 1
        %s241 = smul.addr %s240, 16
        %s242 = scalar_lea.vmem [#allocation2], %s241
        %s243 = smul.u32 4, %s24
        %p244 = scmp.lt.s32.totalorder %s23, 1
        %s245 = scalar_select %p244, %s23, 1
        %p246 = scmp.lt.s32.totalorder %s243, 7
        %s247 = scalar_select %p246, %s243, 7
        %s248 = smul.addr %s245, 8
        %s249 = sadd.s32 %s247, %s248
        %s250 = smul.addr %s249, 8
        %s251 = scalar_lea.vmem %s0, %s250
        %s252 = smul.u32 4, %s24
        %s253 = smul.u32 4, %s24
        %v255 = vld [vmem:[%s251] sm:$0xff]
        %v256 = vld [vmem:[%s251 + $0x8] sm:$0xff]
        %v257 = vld [vmem:[%s251 + $0x10] sm:$0xff]
        %v258 = vld [vmem:[%s251 + $0x18] sm:$0xff]
        %v259 = vld [vmem:[%s1] sm:$0x1]
        %v260 = vld [vmem:[%s2] sm:$0x1]
        %vm261 = vcmask 261120
        %v262 = vsel %vm261, %v255, 0.0
        %263 = vadd.xlane.f32.xlu0 %v262
        %v264 = vpop.xlane.xlu0 %263
        %v265 = vsel %vm261, %v256, 0.0
        %266 = vadd.xlane.f32.xlu0 %v265
        %v267 = vpop.xlane.xlu0 %266
        %v268 = vsel %vm261, %v257, 0.0
        %269 = vadd.xlane.f32.xlu0 %v268
        %v270 = vpop.xlane.xlu0 %269
        %v271 = vsel %vm261, %v258, 0.0
        %272 = vadd.xlane.f32.xlu0 %v271
        %v273 = vpop.xlane.xlu0 %272
        %v274 = vrcp.pop 32.0
        %v275 = vmul.f32 %v264, %v274
        %v276 = vmul.f32 %v267, %v274
        %v277 = vmul.f32 %v270, %v274
        %v278 = vmul.f32 %v273, %v274
        %v279 = vsub.f32 %v255, %v275
        %v280 = vsub.f32 %v256, %v276
        %v281 = vsub.f32 %v257, %v277
        %v282 = vsub.f32 %v258, %v278
        %v283 = vmul.f32 %v279, %v279
        %v284 = vmul.f32 %v280, %v280
        %v285 = vmul.f32 %v281, %v281
        %v286 = vmul.f32 %v282, %v282
        %v287 = vsel %vm261, %v283, 0.0
        %288 = vadd.xlane.f32.xlu0 %v287
        %v289 = vpop.xlane.xlu0 %288
        %v290 = vsel %vm261, %v284, 0.0
        %291 = vadd.xlane.f32.xlu0 %v290
        %v292 = vpop.xlane.xlu0 %291
        %v293 = vsel %vm261, %v285, 0.0
        %294 = vadd.xlane.f32.xlu0 %v293
        %v295 = vpop.xlane.xlu0 %294
        %v296 = vsel %vm261, %v286, 0.0
        %297 = vadd.xlane.f32.xlu0 %v296
        %v298 = vpop.xlane.xlu0 %297
        %v299 = vmul.f32 %v289, %v274
        %v300 = vmul.f32 %v292, %v274
        %v301 = vmul.f32 %v295, %v274
        %v302 = vmul.f32 %v298, %v274
        %v303 = vadd.f32 %v299, 1e-05
        %v304 = vadd.f32 %v300, 1e-05
        %v305 = vadd.f32 %v301, 1e-05
        %v306 = vadd.f32 %v302, 1e-05
        %v307 = vrsqrt.pop %v303
        %v308 = vrsqrt.pop %v304
        %v309 = vrsqrt.pop %v305
        %v310 = vrsqrt.pop %v306
        %v311 = vmul.f32 %v279, %v307
        %v312 = vmul.f32 %v280, %v308
        %v313 = vmul.f32 %v281, %v309
        %v314 = vmul.f32 %v282, %v310
        %v316 = vlaneseq
        %v317 = vshrl.u32 %v316, 7
        %v318 = vsub.s32 0, %v317
        %v319 = vrot.slane %v259, %v318
        %v321 = vmul.f32 %v311, %v319
        %v322 = vmul.f32 %v312, %v319
        %v323 = vmul.f32 %v313, %v319
        %v324 = vmul.f32 %v314, %v319
        %v326 = vlaneseq
        %v327 = vshrl.u32 %v326, 7
        %v328 = vsub.s32 0, %v327
        %v329 = vrot.slane %v260, %v328
        %v331 = vadd.f32 %v321, %v329
        %v332 = vadd.f32 %v322, %v329
        %v333 = vadd.f32 %v323, %v329
        %v334 = vadd.f32 %v324, %v329
        %v335 = vpack.c.bf16 %v332, %v331
        %v336 = vpack.c.bf16 %v334, %v333
        %v337 = vld [vmem:[%s3] sm:$0xf]
        %v338 = vld [vmem:[%s3 + $0x4] sm:$0xf]
        %v339 = vld [vmem:[%s3 + $0x8] sm:$0xf]
        %v340 = vld [vmem:[%s3 + $0xc] sm:$0xf]
        %v341 = vld [vmem:[%s4] sm:$0x1]
        %v343 = vlaneseq
        %v344 = vshrl.u32 %v343, 7
        %v345 = vsub.s32 0, %v344
        %v346 = vrot.slane %v341, %v345
        %v352 = vunpack.c.l.b16 %v337
        %v353 = vunpack.c.l.b16 %v338
        %v354 = vunpack.c.l.b16 %v339
        %v355 = vunpack.c.l.b16 %v340
        %v356 = vpack.c.b16 %v353, %v352
        %v357 = vpack.c.b16 %v355, %v354
        %v361 = vsel %vm261, %v335, 0
        %v364 = vsel %vm261, %v336, 0
        %366 = vmatprep.subr.bf16.mxu0 0
        %367 = vmatpush1.bf16.msra.mxu0 0
        %368 = vmatprep.subr.bf16.mxu0 0
        %369 = vmatpush1.bf16.msra.mxu0 0
        %370 = vmatprep.subr.bf16.mxu0 0
        %371 = vmatpush1.bf16.msra.mxu0 0
        %372 = vmatprep.subr.bf16.mxu0 0
        %373 = vmatpush1.bf16.msra.mxu0 0
        %374 = vmatprep.subr.bf16.mxu0 0
        %375 = vmatpush1.bf16.msra.mxu0 0
        %376 = vmatprep.subr.bf16.mxu0 0
        %377 = vmatpush1.bf16.msra.mxu0 0
        %378 = vmatprep.subr.bf16.mxu0 0
        %379 = vmatpush1.bf16.msra.mxu0 %v357
        %380 = vmatprep.subr.bf16.mxu0 0
        %381 = vmatpush1.bf16.msra.mxu0 %v356
        %382 = vmatprep.subr.bf16.mxu0 0
        %383 = vmatpush2.bf16.msra.mxu0 0
        %384 = vmatprep.subr.bf16.mxu0 0
        %385 = vmatpush2.bf16.msra.mxu0 0
        %386 = vmatprep.subr.bf16.mxu0 0
        %387 = vmatpush2.bf16.msra.mxu0 0
        %388 = vmatprep.subr.bf16.mxu0 0
        %389 = vmatpush2.bf16.msra.mxu0 0
        %390 = vmatprep.subr.bf16.mxu0 0
        %391 = vmatpush2.bf16.msra.mxu0 0
        %392 = vmatprep.subr.bf16.mxu0 0
        %393 = vmatpush2.bf16.msra.mxu0 0
        %394 = vmatprep.subr.bf16.mxu0 0
        %395 = vmatpush2.bf16.msra.mxu0 0
        %396 = vmatprep.subr.bf16.mxu0 0
        %397 = vmatpush2.bf16.msra.mxu0 0
        %398 = vmatprep.mubr.bf16.mxu0 0
        %399 = vmatmul.mubr.bf16.gmra.mxu0 %v361
        %v400 = vpop.f32.mrf.mxu0
        %v401 = vadd.f32 %v346, %v400
        %v402 = vpop.f32.mrf.mxu0
        %v403 = vpop.f32.mrf.mxu0
        %v404 = vadd.f32 %v346, %v403
        %v405 = vpop.f32.mrf.mxu0
        %406 = vmatprep.mubr.bf16.mxu0 0
        %407 = vmatmul.mubr.bf16.gmra.mxu0 %v364
        %v408 = vpop.f32.mrf.mxu0
        %v409 = vadd.f32 %v346, %v408
        %v410 = vpop.f32.mrf.mxu0
        %v411 = vpop.f32.mrf.mxu0
        %v412 = vadd.f32 %v346, %v411
        %v413 = vpop.f32.mrf.mxu0
        %414 = vdwg.mxu0
        %v415 = vpack.c.bf16 %v404, %v401
        %v416 = vpack.c.bf16 %v412, %v409
        %v419 = vunpack.c.l.b16 %v415
        %v420 = vunpack.c.h.b16 %v415
        %v421 = vunpack.c.l.b16 %v416
        %v422 = vunpack.c.h.b16 %v416
        %v423 = vpack.c.b16 %v419, %v419
        %v424 = vpack.c.b16 %v420, %v420
        %v425 = vpack.c.b16 %v421, %v421
        %v426 = vpack.c.b16 %v422, %v422
        %vm431 = vcmask 781312
        %432 = vst.msk [vmem:[%s242] sm:$0xf] %vm431, %v423
        %433 = vst.msk [vmem:[%s242 + $0x4] sm:$0xf] %vm431, %v424
        %434 = vst.msk [vmem:[%s242 + $0x8] sm:$0xf] %vm431, %v425
        %435 = vst.msk [vmem:[%s242 + $0xc] sm:$0xf] %vm431, %v426
        %s436 = sand.u32 %s153, 1
        %s437 = scalar_lea.sflag [#allocation3], %s436
        %s438 = sand.u32 %s153, 1
        %s439 = smul.addr %s438, 16
        %s440 = scalar_lea.vmem [#allocation2], %s439
        // Predicated region
        $region41: #{tpu_custom_call.1} parent=39 // pred_check
          %p441 = pneg %p163
        $region42: #{tpu_custom_call.1} parent=39 // pred_check_branch
          %443 = sbr.rel (%p441) target = $region44
        $region43: #{tpu_custom_call.1} parent=39 // pred_region
          %s444 = smul.u32 4, %s24
          %s446 = ssub.s32 256, 256
          %447 = vsyncadd %s437, %s446
          %s448 = smul.addr %s23, 8
          %s449 = sadd.s32 %s444, %s448
          %s450 = smul.addr %s449, 64
          %s451 = scalar_lea.hbm %s5, %s450
          %s452 = sshll.u32 %s440, 4
          %s453 = int_to_ptr.vmem [resolvable:$true] %s452
          %458 = dma.vmem_to_hbm [thread:$0]  %s453, 256, %s451, %s437, 64, 64, 4
        $region44: #{tpu_custom_call.1} parent=39 // pred_fallthru
          _
      $region40: #{tpu_custom_call.1} parent=5 // pred_fallthru
        _
      %p459 = scmp.le.s32.totalorder 2, %s14
      // Predicated region
      $region45: #{tpu_custom_call.1} parent=5 // pred_check
        %p460 = pneg %p459
      $region46: #{tpu_custom_call.1} parent=5 // pred_check_branch
        %462 = sbr.rel (%p460) target = $region48
      $region47: #{tpu_custom_call.1} parent=5 // pred_region
        %s463 = ssub.s32 %s14, 2
        // Predicated region
        $region49: #{tpu_custom_call.1} parent=47 // pred_check
          %p464 = pneg %p169
        $region50: #{tpu_custom_call.1} parent=47 // pred_check_branch
          %466 = sbr.rel (%p464) target = $region52
        $region51: #{tpu_custom_call.1} parent=47 // pred_region
          %s467 = sand.u32 %s154, 1
          %s468 = scalar_lea.sflag [#allocation3], %s467
          %s469 = sand.u32 %s154, 1
          %s470 = smul.addr %s469, 16
          %s471 = scalar_lea.vmem [#allocation2], %s470
          %472 = dma.done %s468, 256
        $region52: #{tpu_custom_call.1} parent=47 // pred_fallthru
          _
      $region48: #{tpu_custom_call.1} parent=5 // pred_fallthru
        _
    $region6: #{tpu_custom_call.1} parent=1 // loop_footer
      %s18 = sadd.s32 1, %s14
    $region7: #{tpu_custom_call.1} parent=1 // loop_footer_branch
      %13 = sbr.rel target = $region3
    $region8: #{tpu_custom_call.1} parent=1 // loop_exit
      _
    %473 = vsyncpa [#allocation3], 1
    %s474 = scalar_lea.sflag [#allocation3], 1
    %475 = vsyncpa %s474, 1

</llo_original>
